<compile_context>
chip_gen: v5e
topology: v5e:2x2
jax: 0.10.0
libtpu: 0.0.40
codegen_flags: <defaults>
</compile_context>

<pallas_src>
import functools

import jax
import jax.numpy as jnp
from jax import lax
from jax.experimental import pallas as pl
from jax.experimental.pallas import tpu as pltpu


def _round_up(x, m):
    return ((x + m - 1) // m) * m


def _reinforce_kernel(seq_ref, logp_ref, base_ref, rew_ref, acc_ref, *,
                      n_rows, ragged, dense_rewards, baseline_loss):
    """Reduces one row-tile of the REINFORCE loss into acc_ref.

    acc_ref rows (lane 0 is read by the wrapper):
      0: sum(log_probs * rewards * mask)      (negated in the wrapper)
      1: sum(mask)
      2: sum(baseline)
      3: sum((rewards - baseline)^2 * mask)   (only if baseline_loss)
      4: sum(rewards)                         (only if dense_rewards)
    """
    i = pl.program_id(0)
    tile_rows, seq_len = seq_ref.shape

    @pl.when(i == 0)
    def _init():
        acc_ref[...] = jnp.zeros_like(acc_ref)

    seq = seq_ref[...]
    logp = logp_ref[...].astype(jnp.float32)
    base = base_ref[...].astype(jnp.float32)
    rew = rew_ref[...].astype(jnp.float32)          # (tile, T) or (tile, 1)

    # Shifted mask: mask[:, 0] = 1 ; mask[:, t] = (seq[:, t-1] > 0) for t >= 1.
    # One-lane shift implemented as a tiny superdiagonal matmul on the idle
    # MXU: (m @ S)[:, t] = m[:, t-1], column 0 is exactly zero.
    m = (seq > 0).astype(jnp.float32)
    if seq_len > 1:
        srow = lax.broadcasted_iota(jnp.int32, (seq_len, seq_len), 0)
        scol = lax.broadcasted_iota(jnp.int32, (seq_len, seq_len), 1)
        shift = (scol == srow + 1).astype(jnp.float32)
        prev = jnp.dot(m, shift, preferred_element_type=jnp.float32)
        lane = lax.broadcasted_iota(jnp.int32, (tile_rows, seq_len), 1)
        mask = jnp.where(lane == 0, jnp.float32(1.0), prev)
    else:
        mask = jnp.ones_like(m)

    if ragged:
        # Rows past n_rows in the (partial) last block hold undefined VMEM
        # data; SELECT (never multiply) so garbage/NaN cannot reach a product.
        row = lax.broadcasted_iota(jnp.int32, (tile_rows, seq_len), 0)
        valid = (i * tile_rows + row) < n_rows
        zero = jnp.float32(0.0)
        mask = jnp.where(valid, mask, zero)
        logp = jnp.where(valid, logp, zero)
        base = jnp.where(valid, base, zero)
        rew = jnp.where(valid, rew, zero)

    a_blk = jnp.sum(logp * rew * mask)
    m_blk = jnp.sum(mask)
    b_blk = jnp.sum(base)

    rows8 = lax.broadcasted_iota(jnp.int32, (8, 128), 0)
    upd = jnp.where(rows8 == 0, a_blk, jnp.float32(0.0))
    upd = jnp.where(rows8 == 1, m_blk, upd)
    upd = jnp.where(rows8 == 2, b_blk, upd)
    if baseline_loss:
        v_blk = jnp.sum((rew - base) ** 2 * mask)
        upd = jnp.where(rows8 == 3, v_blk, upd)
    if dense_rewards:
        r_blk = jnp.sum(rew)
        upd = jnp.where(rows8 == 4, r_blk, upd)
    acc_ref[...] += upd


@functools.partial(jax.jit, static_argnames=("baseline_loss", "tile_rows"))
def reinforce_criterion(seq, seq_log_probs, baseline, rewards,
                        baseline_loss=True, tile_rows=None):
    """JAX/Pallas equivalent of ReinforceCriterion.forward with rewards given.

    Args:
      seq:            (batch, 5, seq_len) int token ids
      seq_log_probs:  (batch, 5, seq_len) float log-probs (any float dtype)
      baseline:       (batch, 5, seq_len) float value-baseline
      rewards:        (batch, 5, seq_len) dense rewards, or (batch, 5, 1) /
                      (batch, 1, 1) per-row/per-batch scalar rewards.
      tile_rows:      optional row-tile override (multiple of 8); auto-sized
                      otherwise.
    Returns:
      (total_loss, avg_reward, avg_baseline) float32 scalars.
    """
    B, S, T = seq.shape
    R = B * S
    N = R * T

    # Zero-copy row-major views: (batch*story) sequences on the tiled axis,
    # time on the minor axis.  No transposes, no dtype upcasts in the wrapper.
    seq_2d = seq.reshape(R, T)
    logp_2d = seq_log_probs.reshape(R, T)
    base_2d = baseline.reshape(R, T)

    if rewards.shape[2] == 1:
        # Scalar reward per row/batch: stream the tiny (R, 1) tensor; it is
        # broadcast over time on the VPU inside the kernel.
        dense_rewards = False
        rew_2d = jnp.broadcast_to(rewards, (B, S, 1)).reshape(R, 1)
        rew_cols = 1
    else:
        dense_rewards = True
        rew_2d = jnp.broadcast_to(rewards, seq.shape).reshape(R, T)
        rew_cols = T

    # Tile sizing: ~1 MiB of VMEM per input block (accumulator is tiny now),
    # tile_rows a multiple of 8 (or the full row extent for small inputs).
    if tile_rows is None:
        lane_bytes = _round_up(T, 128) * 4
        tile_rows = max(8, ((1 << 20) // lane_bytes) // 8 * 8)
    if tile_rows >= R:
        tile_rows = R
    n_tiles = pl.cdiv(R, tile_rows)
    ragged = (R % tile_rows) != 0

    kernel = functools.partial(
        _reinforce_kernel, n_rows=R, ragged=ragged,
        dense_rewards=dense_rewards, baseline_loss=baseline_loss)

    row_idx = lambda i: (i, 0)
    acc = pl.pallas_call(
        kernel,
        out_shape=jax.ShapeDtypeStruct((8, 128), jnp.float32),
        grid_spec=pltpu.PrefetchScalarGridSpec(
            num_scalar_prefetch=0,
            grid=(n_tiles,),
            in_specs=[
                pl.BlockSpec((tile_rows, T), row_idx),         # seq
                pl.BlockSpec((tile_rows, T), row_idx),         # log-probs
                pl.BlockSpec((tile_rows, T), row_idx),         # baseline
                pl.BlockSpec((tile_rows, rew_cols), row_idx),  # rewards
            ],
            out_specs=pl.BlockSpec((8, 128), lambda i: (0, 0)),
        ),
        compiler_params=pltpu.CompilerParams(
            dimension_semantics=("arbitrary",),
            vmem_limit_bytes=48 * 1024 * 1024),
    )(seq_2d, logp_2d, base_2d, rew_2d)

    # Cheap scalar math on the tiny (8, 128) partial-sum block.
    sums = acc[:, 0]
    mask_sum = sums[1]
    action_loss = -sums[0] / mask_sum
    if baseline_loss:
        total_loss = action_loss + sums[3] / mask_sum
    else:
        total_loss = action_loss
    avg_baseline = sums[2] / N
    if dense_rewards:
        avg_reward = sums[4] / N
    else:
        # Mean over the broadcast rewards equals the mean of the tiny tensor.
        avg_reward = jnp.mean(rewards.astype(jnp.float32))
    return total_loss, avg_reward, avg_baseline


# TODO(synk): _cal_rewards (METEOR/CIDEr/Bleu/ROUGE scoring of decoded stories)
# and model.sample_* rollouts are host-side text/model ops with no Pallas
# equivalent; rewards must be supplied to forward().


def _reference(seq, logp, base, rew, baseline_loss=True):
    """Pure-JAX reference mirroring the PyTorch forward()."""
    rew = jnp.broadcast_to(rew, seq.shape).astype(jnp.float32)
    logp = logp.astype(jnp.float32)
    base = base.astype(jnp.float32)
    mask = (seq > 0).astype(jnp.float32)
    if seq.shape[2] > 1:
        ones = jnp.ones(mask.shape[:2] + (1,), jnp.float32)
        mask = jnp.concatenate([ones, mask[:, :, :-1]], axis=2)
    else:
        mask = jnp.ones_like(mask)
    msum = jnp.sum(mask)
    action = jnp.sum(-logp * rew * mask) / msum
    total = action
    if baseline_loss:
        total = total + jnp.sum((rew - base) ** 2 * mask) / msum
    return total, jnp.mean(rew), jnp.mean(base)


if __name__ == "__main__":
    key = jax.random.PRNGKey(0)
    ks = jax.random.split(key, 8)

    # Shapes follow the module contract: (batch_size, 5, seq_length).
    B, S, T = 2, 5, 8
    shape = (B, S, T)
    seq = jax.random.randint(ks[0], shape, 0, 10, dtype=jnp.int32)
    logp = -jax.random.uniform(ks[1], shape, jnp.float32, 0.1, 3.0)
    base = jax.random.uniform(ks[2], shape, jnp.float32, 0.0, 1.0)

    results, references = [], []

    # Case 1: rollout()-style dense per-timestep rewards, with value loss.
    rew_full = jax.random.uniform(ks[3], shape, jnp.float32)
    results.append(reinforce_criterion(seq, logp, base, rew_full,
                                       baseline_loss=True))
    references.append(_reference(seq, logp, base, rew_full, True))

    # Case 2: selfcritical()-style scalar reward per batch element, no value
    # loss; the (B, 1, 1) rewards are never broadcast to (B, 5, T) in HBM.
    rew_scalar = jax.random.uniform(ks[4], (B, 1, 1), jnp.float32)
    results.append(reinforce_criterion(seq, logp, base, rew_scalar,
                                       baseline_loss=False))
    references.append(_reference(seq, logp, base, rew_scalar, False))

    # Case 3: exercises the multi-tile + ragged-edge path (65 rows, tile of 16)
    # and a seq_len that is not a multiple of 8.
    B3, T3 = 13, 6
    shape3 = (B3, S, T3)
    seq3 = jax.random.randint(ks[5], shape3, 0, 6, dtype=jnp.int32)
    logp3 = -jax.random.uniform(ks[6], shape3, jnp.float32, 0.1, 3.0)
    base3 = jax.random.uniform(ks[7], shape3, jnp.float32, 0.0, 1.0)
    rew3 = jax.random.uniform(jax.random.PRNGKey(1), shape3, jnp.float32)
    results.append(reinforce_criterion(seq3, logp3, base3, rew3,
                                       baseline_loss=True, tile_rows=16))
    references.append(_reference(seq3, logp3, base3, rew3, True))

    results = jax.block_until_ready(results)

    for got, want in zip(results, references):
        for g, w in zip(got, want):
            assert jnp.allclose(g, w, rtol=1e-5, atol=1e-5), (g, w)

    print("KERNEL_OK")
</pallas_src>

<mosaic_0001>
module attributes {stable_mosaic.version = 11 : i64} {
  func.func @_reinforce_kernel(%arg0: i32, %arg1: memref<10x8xi32, #tpu.memory_space<vmem>>, %arg2: memref<10x8xf32, #tpu.memory_space<vmem>>, %arg3: memref<10x8xf32, #tpu.memory_space<vmem>>, %arg4: memref<10x8xf32, #tpu.memory_space<vmem>>, %arg5: memref<8x128xf32, #tpu.memory_space<vmem>>) attributes {dimension_semantics = [#tpu.dimension_semantics<arbitrary>], iteration_bounds = array<i64: 1>, scalar_prefetch = 0 : i64, scratch_operands = 0 : i64, tpu.core_type = #tpu.core_type<tc>, window_params = [{transform_indices = @transform_0, window_bounds = array<i64: 10, 8>}, {transform_indices = @transform_1, window_bounds = array<i64: 10, 8>}, {transform_indices = @transform_2, window_bounds = array<i64: 10, 8>}, {transform_indices = @transform_3, window_bounds = array<i64: 10, 8>}, {pipeline_mode = #tpu.pipeline_mode<synchronous>, transform_indices = @transform_4, window_bounds = array<i64: 8, 128>}]} {
    %c0_i32 = arith.constant 0 : i32
    %0 = arith.cmpi eq, %arg0, %c0_i32 : i32
    %1 = arith.extui %0 : i1 to i32
    %c0_i32_0 = arith.constant 0 : i32
    %2 = arith.cmpi ne, %1, %c0_i32_0 : i32
    scf.if %2 {
      %cst_23 = arith.constant 0.000000e+00 : f32
      %74 = vector.broadcast %cst_23 : f32 to vector<8x128xf32>
      %c0_24 = arith.constant 0 : index
      %c0_25 = arith.constant 0 : index
      %75 = vector.load %arg5[%c0_24, %c0_25] : memref<8x128xf32, #tpu.memory_space<vmem>>, vector<8x128xf32>
      tpu.vector_store %arg5[%c0_24, %c0_25], %74 {strides = array<i32>} : memref<8x128xf32, #tpu.memory_space<vmem>>, vector<8x128xf32>,
    } else {
    }
    %c0 = arith.constant 0 : index
    %c0_1 = arith.constant 0 : index
    %3 = vector.load %arg1[%c0, %c0_1] : memref<10x8xi32, #tpu.memory_space<vmem>>, vector<10x8xi32>
    %c0_2 = arith.constant 0 : index
    %c0_3 = arith.constant 0 : index
    %4 = vector.load %arg2[%c0_2, %c0_3] : memref<10x8xf32, #tpu.memory_space<vmem>>, vector<10x8xf32>
    %c0_4 = arith.constant 0 : index
    %c0_5 = arith.constant 0 : index
    %5 = vector.load %arg3[%c0_4, %c0_5] : memref<10x8xf32, #tpu.memory_space<vmem>>, vector<10x8xf32>
    %c0_6 = arith.constant 0 : index
    %c0_7 = arith.constant 0 : index
    %6 = vector.load %arg4[%c0_6, %c0_7] : memref<10x8xf32, #tpu.memory_space<vmem>>, vector<10x8xf32>
    %c0_i32_8 = arith.constant 0 : i32
    %7 = vector.broadcast %c0_i32_8 : i32 to vector<10x8xi32>
    %8 = arith.cmpi sgt, %3, %7 : vector<10x8xi32>
    %9 = arith.extui %8 : vector<10x8xi1> to vector<10x8xi32>
    %10 = arith.sitofp %9 : vector<10x8xi32> to vector<10x8xf32>
    %11 = tpu.iota {dimensions = array<i32: 0>} : vector<8x8xi32>
    %12 = tpu.iota {dimensions = array<i32: 1>} : vector<8x8xi32>
    %c1_i32 = arith.constant 1 : i32
    %13 = vector.broadcast %c1_i32 : i32 to vector<8x8xi32>
    %14 = arith.addi %11, %13 : vector<8x8xi32>
    %15 = arith.cmpi eq, %12, %14 : vector<8x8xi32>
    %16 = arith.extui %15 : vector<8x8xi1> to vector<8x8xi32>
    %17 = arith.sitofp %16 : vector<8x8xi32> to vector<8x8xf32>
    %cst = arith.constant dense<0.000000e+00> : vector<10x8xf32>
    %18 = tpu.matmul %10, %17, %cst {dimension_numbers = #tpu.dot_dimension_numbers<[1], [0], [0], [1], [0, 0, 1, 1], [], []>} : vector<10x8xf32>, vector<8x8xf32>, vector<10x8xf32> -> vector<10x8xf32>
    %19 = tpu.iota {dimensions = array<i32: 1>} : vector<10x8xi32>
    %c0_i32_9 = arith.constant 0 : i32
    %20 = vector.broadcast %c0_i32_9 : i32 to vector<10x8xi32>
    %21 = arith.cmpi eq, %19, %20 : vector<10x8xi32>
    %cst_10 = arith.constant 1.000000e+00 : f32
    %22 = vector.broadcast %cst_10 : f32 to vector<10x8xf32>
    %23 = arith.select %21, %22, %18 : vector<10x8xi1>, vector<10x8xf32>
    %24 = arith.mulf %4, %6 : vector<10x8xf32>
    %25 = arith.mulf %24, %23 : vector<10x8xf32>
    %26 = vector.shape_cast %25 : vector<10x8xf32> to vector<1x10x8xf32>
    %cst_11 = arith.constant dense<0.000000e+00> : vector<1xf32>
    %27 = vector.multi_reduction <add>, %26, %cst_11 [1, 2] : vector<1x10x8xf32> to vector<1xf32>
    %28 = vector.shape_cast %27 : vector<1xf32> to vector<1x1x1xf32>
    %29 = vector.extract %28[0, 0, 0] : f32 from vector<1x1x1xf32>
    %30 = vector.shape_cast %23 : vector<10x8xf32> to vector<1x10x8xf32>
    %cst_12 = arith.constant dense<0.000000e+00> : vector<1xf32>
    %31 = vector.multi_reduction <add>, %30, %cst_12 [1, 2] : vector<1x10x8xf32> to vector<1xf32>
    %32 = vector.shape_cast %31 : vector<1xf32> to vector<1x1x1xf32>
    %33 = vector.extract %32[0, 0, 0] : f32 from vector<1x1x1xf32>
    %34 = vector.shape_cast %5 : vector<10x8xf32> to vector<1x10x8xf32>
    %cst_13 = arith.constant dense<0.000000e+00> : vector<1xf32>
    %35 = vector.multi_reduction <add>, %34, %cst_13 [1, 2] : vector<1x10x8xf32> to vector<1xf32>
    %36 = vector.shape_cast %35 : vector<1xf32> to vector<1x1x1xf32>
    %37 = vector.extract %36[0, 0, 0] : f32 from vector<1x1x1xf32>
    %38 = tpu.iota {dimensions = array<i32: 0>} : vector<8x128xi32>
    %c0_i32_14 = arith.constant 0 : i32
    %39 = vector.broadcast %c0_i32_14 : i32 to vector<8x128xi32>
    %40 = arith.cmpi eq, %38, %39 : vector<8x128xi32>
    %cst_15 = arith.constant 0.000000e+00 : f32
    %41 = vector.broadcast %29 : f32 to vector<8x128xf32>
    %42 = vector.broadcast %cst_15 : f32 to vector<8x128xf32>
    %43 = arith.select %40, %41, %42 : vector<8x128xi1>, vector<8x128xf32>
    %c1_i32_16 = arith.constant 1 : i32
    %44 = vector.broadcast %c1_i32_16 : i32 to vector<8x128xi32>
    %45 = arith.cmpi eq, %38, %44 : vector<8x128xi32>
    %46 = vector.broadcast %33 : f32 to vector<8x128xf32>
    %47 = arith.select %45, %46, %43 : vector<8x128xi1>, vector<8x128xf32>
    %c2_i32 = arith.constant 2 : i32
    %48 = vector.broadcast %c2_i32 : i32 to vector<8x128xi32>
    %49 = arith.cmpi eq, %38, %48 : vector<8x128xi32>
    %50 = vector.broadcast %37 : f32 to vector<8x128xf32>
    %51 = arith.select %49, %50, %47 : vector<8x128xi1>, vector<8x128xf32>
    %52 = arith.subf %6, %5 : vector<10x8xf32>
    %53 = arith.mulf %52, %52 : vector<10x8xf32>
    %54 = arith.mulf %53, %23 : vector<10x8xf32>
    %55 = vector.shape_cast %54 : vector<10x8xf32> to vector<1x10x8xf32>
    %cst_17 = arith.constant dense<0.000000e+00> : vector<1xf32>
    %56 = vector.multi_reduction <add>, %55, %cst_17 [1, 2] : vector<1x10x8xf32> to vector<1xf32>
    %57 = vector.shape_cast %56 : vector<1xf32> to vector<1x1x1xf32>
    %58 = vector.extract %57[0, 0, 0] : f32 from vector<1x1x1xf32>
    %c3_i32 = arith.constant 3 : i32
    %59 = vector.broadcast %c3_i32 : i32 to vector<8x128xi32>
    %60 = arith.cmpi eq, %38, %59 : vector<8x128xi32>
    %61 = vector.broadcast %58 : f32 to vector<8x128xf32>
    %62 = arith.select %60, %61, %51 : vector<8x128xi1>, vector<8x128xf32>
    %63 = vector.shape_cast %6 : vector<10x8xf32> to vector<1x10x8xf32>
    %cst_18 = arith.constant dense<0.000000e+00> : vector<1xf32>
    %64 = vector.multi_reduction <add>, %63, %cst_18 [1, 2] : vector<1x10x8xf32> to vector<1xf32>
    %65 = vector.shape_cast %64 : vector<1xf32> to vector<1x1x1xf32>
    %66 = vector.extract %65[0, 0, 0] : f32 from vector<1x1x1xf32>
    %c4_i32 = arith.constant 4 : i32
    %67 = vector.broadcast %c4_i32 : i32 to vector<8x128xi32>
    %68 = arith.cmpi eq, %38, %67 : vector<8x128xi32>
    %69 = vector.broadcast %66 : f32 to vector<8x128xf32>
    %70 = arith.select %68, %69, %62 : vector<8x128xi1>, vector<8x128xf32>
    %c0_19 = arith.constant 0 : index
    %c0_20 = arith.constant 0 : index
    %71 = vector.load %arg5[%c0_19, %c0_20] : memref<8x128xf32, #tpu.memory_space<vmem>>, vector<8x128xf32>
    %72 = arith.addf %71, %70 : vector<8x128xf32>
    %c0_21 = arith.constant 0 : index
    %c0_22 = arith.constant 0 : index
    %73 = vector.load %arg5[%c0_21, %c0_22] : memref<8x128xf32, #tpu.memory_space<vmem>>, vector<8x128xf32>
    tpu.vector_store %arg5[%c0_21, %c0_22], %72 {strides = array<i32>} : memref<8x128xf32, #tpu.memory_space<vmem>>, vector<8x128xf32>,
    return
  }
  func.func @transform_0(%arg0: i32) -> (i32, i32) {
    %c0_i32 = arith.constant 0 : i32
    %c0_i32_0 = arith.constant 0 : i32
    return %arg0, %c0_i32 : i32, i32
  }
  func.func @transform_1(%arg0: i32) -> (i32, i32) {
    %c0_i32 = arith.constant 0 : i32
    %c0_i32_0 = arith.constant 0 : i32
    return %arg0, %c0_i32 : i32, i32
  }
  func.func @transform_2(%arg0: i32) -> (i32, i32) {
    %c0_i32 = arith.constant 0 : i32
    %c0_i32_0 = arith.constant 0 : i32
    return %arg0, %c0_i32 : i32, i32
  }
  func.func @transform_3(%arg0: i32) -> (i32, i32) {
    %c0_i32 = arith.constant 0 : i32
    %c0_i32_0 = arith.constant 0 : i32
    return %arg0, %c0_i32 : i32, i32
  }
  func.func @transform_4(%arg0: i32) -> (i32, i32) {
    %c0_i32 = arith.constant 0 : i32
    %c0_i32_0 = arith.constant 0 : i32
    %c0_i32_1 = arith.constant 0 : i32
    return %c0_i32, %c0_i32_0 : i32, i32
  }
}

</mosaic_0001>

<llo_original>
// kernel: reinforce_criterion.1
$region0: #{reinforce_criterion.1}
  #allocation0 [shape = 'u32[]', space=smem, size = 0x4, offset = 0x4, fixed_abs, tag = 'smem constant byte address 0x4 - core index']
  #allocation1 [shape = 'u32[72,128]{1,0:T(1,128)}', space=vmem, size = 0x9000, scoped, tag = 'internal scratch']
  %s0 = inlined_call_operand.vmem [shape: s32[10,8], index: 0, kind: input, shape index: {}]
  %s1 = inlined_call_operand.vmem [shape: f32[10,8], index: 1, kind: input, shape index: {}]
  %s2 = inlined_call_operand.vmem [shape: f32[10,8], index: 2, kind: input, shape index: {}]
  %s3 = inlined_call_operand.vmem [shape: f32[10,8], index: 3, kind: input, shape index: {}]
  %s4 = inlined_call_operand.vmem [shape: f32[8,128], index: 4, kind: output, shape index: {}]
  %s5 = sld [smem:[#allocation0]]
  $region30: #{reinforce_criterion.1} parent=0
    _
  %s7 = ssub.s32 1, %s5
  %s8 = scalar_select 0, %s7, %s5
  // Predicated region
  $region2: #{reinforce_criterion.1} parent=0 // pred_check
    _
  $region3: #{reinforce_criterion.1} parent=0 // pred_check_branch
    %10 = sbr.rel (0) target = $region5
  $region4: #{reinforce_criterion.1} parent=0 // pred_region
    _
  $region5: #{reinforce_criterion.1} parent=0 // pred_fallthru
    _
  // Predicated region
  $region6: #{reinforce_criterion.1} parent=0 // pred_check
    _
  $region7: #{reinforce_criterion.1} parent=0 // pred_check_branch
    %12 = sbr.rel (0) target = $region9
  $region8: #{reinforce_criterion.1} parent=0 // pred_region
    _
  $region9: #{reinforce_criterion.1} parent=0 // pred_fallthru
    _
  // Predicated region
  $region10: #{reinforce_criterion.1} parent=0 // pred_check
    _
  $region11: #{reinforce_criterion.1} parent=0 // pred_check_branch
    %14 = sbr.rel (0) target = $region13
  $region12: #{reinforce_criterion.1} parent=0 // pred_region
    _
  $region13: #{reinforce_criterion.1} parent=0 // pred_fallthru
    _
  // Predicated region
  $region14: #{reinforce_criterion.1} parent=0 // pred_check
    _
  $region15: #{reinforce_criterion.1} parent=0 // pred_check_branch
    %16 = sbr.rel (0) target = $region17
  $region16: #{reinforce_criterion.1} parent=0 // pred_region
    _
  $region17: #{reinforce_criterion.1} parent=0 // pred_fallthru
    _
  %p17 = scmp.eq.s32.totalorder 0, 0
  // Predicated region
  $region18: #{reinforce_criterion.1} parent=0 // pred_check
    %p18 = pneg %p17
  $region19: #{reinforce_criterion.1} parent=0 // pred_check_branch
    %20 = sbr.rel (%p18) target = $region21
  $region20: #{reinforce_criterion.1} parent=0 // pred_region
    %21 = vst [vmem:[%s4] sm:$0xff] 0.0
  $region21: #{reinforce_criterion.1} parent=0 // pred_fallthru
    _
  %v22 = vld [vmem:[%s0] sm:$0xff]
  %v23 = vld [vmem:[%s0 + $0x8] sm:$0x3]
  %v24 = vld [vmem:[%s1] sm:$0xff]
  %v25 = vld [vmem:[%s1 + $0x8] sm:$0x3]
  %v26 = vld [vmem:[%s2] sm:$0xff]
  %v27 = vld [vmem:[%s2 + $0x8] sm:$0x3]
  %v28 = vld [vmem:[%s3] sm:$0xff]
  %v29 = vld [vmem:[%s3 + $0x8] sm:$0x3]
  %vm30 = vcmp.gt.s32.totalorder %v22, 0
  %vm31 = vcmp.gt.s32.totalorder %v23, 0
  %v32 = vsel %vm30, 1, 0
  %v33 = vsel %vm31, 1, 0
  %v34 = vcvt.s32.f32 %v32
  %v35 = vcvt.s32.f32 %v33
  %v36 = vlaneseq
  %v37 = vshrl.u32 %v36, 7
  %v38 = vlaneseq
  %v39 = vand.u32 %v38, 127
  %v40 = vadd.s32 %v37, 1
  %vm41 = vcmp.eq.s32.totalorder %v39, %v40
  %v42 = vsel %vm41, 1, 0
  %v43 = vcvt.s32.f32 %v42
  %vm44 = vcmask 64512
  %v46 = vsel %vm44, %v34, 0
  %v49 = vsel %vm44, %v35, 0
  %51 = vmatpush.msra.mxu0 0.0
  %52 = vmatpush.msra.mxu0 0.0
  %53 = vmatpush.msra.mxu0 0.0
  %54 = vmatpush.msra.mxu0 0.0
  %55 = vmatpush.msra.mxu0 0.0
  %56 = vmatpush.msra.mxu0 0.0
  %57 = vmatpush.msra.mxu0 0.0
  %58 = vmatpush.msra.mxu0 0.0
  %59 = vmatpush.msra.mxu0 0.0
  %60 = vmatpush.msra.mxu0 0.0
  %61 = vmatpush.msra.mxu0 0.0
  %62 = vmatpush.msra.mxu0 0.0
  %63 = vmatpush.msra.mxu0 0.0
  %64 = vmatpush.msra.mxu0 0.0
  %65 = vmatpush.msra.mxu0 0.0
  %66 = vmatpush.msra.mxu0 %v43
  %67 = vmatmul.f32.gmra.mxu0 %v46
  %v68 = vpop.f32.mrf.mxu0
  %v69 = vadd.f32 0.0, %v68
  %70 = vmatmul.f32.gmra.mxu0 %v49
  %v71 = vpop.f32.mrf.mxu0
  %v72 = vadd.f32 0.0, %v71
  %73 = vdwg.mxu0
  %vm74 = vcmp.eq.s32.totalorder %v39, 0
  %v75 = vsel %vm74, 1.0, %v69
  %v76 = vsel %vm74, 1.0, %v72
  %v77 = vmul.f32 %v24, %v28
  %v78 = vmul.f32 %v25, %v29
  %v79 = vmul.f32 %v77, %v75
  %v80 = vmul.f32 %v78, %v76
  %v81 = vsel %vm44, %v79, 0.0
  %vm82 = vcmask 58368
  %v83 = vsel %vm82, %v80, 0.0
  %v84 = vadd.f32 %v81, %v83
  %85 = vadd.xlane.f32.xlu0 %v84
  %v86 = vpop.xlane.xlu0 %85
  %v87 = vrot.slane %v86, 4
  %v88 = vadd.f32 %v86, %v87
  %v89 = vrot.slane %v88, 2
  %v90 = vadd.f32 %v88, %v89
  %v91 = vrot.slane %v90, 1
  %v92 = vadd.f32 %v90, %v91
  %s93 = vtos %v92
  %v94 = vsel %vm44, %v75, 0.0
  %v95 = vsel %vm82, %v76, 0.0
  %v96 = vadd.f32 %v94, %v95
  %97 = vadd.xlane.f32.xlu0 %v96
  %v98 = vpop.xlane.xlu0 %97
  %v99 = vrot.slane %v98, 4
  %v100 = vadd.f32 %v98, %v99
  %v101 = vrot.slane %v100, 2
  %v102 = vadd.f32 %v100, %v101
  %v103 = vrot.slane %v102, 1
  %v104 = vadd.f32 %v102, %v103
  %s105 = vtos %v104
  %v106 = vsel %vm44, %v26, 0.0
  %v107 = vsel %vm82, %v27, 0.0
  %v108 = vadd.f32 %v106, %v107
  %109 = vadd.xlane.f32.xlu0 %v108
  %v110 = vpop.xlane.xlu0 %109
  %v111 = vrot.slane %v110, 4
  %v112 = vadd.f32 %v110, %v111
  %v113 = vrot.slane %v112, 2
  %v114 = vadd.f32 %v112, %v113
  %v115 = vrot.slane %v114, 1
  %v116 = vadd.f32 %v114, %v115
  %s117 = vtos %v116
  %vm118 = vcmp.eq.s32.totalorder %v37, 0
  %v119 = vstv %s93
  %v120 = vsel %vm118, %v119, 0.0
  %vm121 = vcmp.eq.s32.totalorder %v37, 1
  %v122 = vstv %s105
  %v123 = vsel %vm121, %v122, %v120
  %vm124 = vcmp.eq.s32.totalorder %v37, 2
  %v125 = vstv %s117
  %v126 = vsel %vm124, %v125, %v123
  %v127 = vsub.f32 %v28, %v26
  %v128 = vsub.f32 %v29, %v27
  %v129 = vmul.f32 %v127, %v127
  %v130 = vmul.f32 %v128, %v128
  %v131 = vmul.f32 %v129, %v75
  %v132 = vmul.f32 %v130, %v76
  %v133 = vsel %vm44, %v131, 0.0
  %v134 = vsel %vm82, %v132, 0.0
  %v135 = vadd.f32 %v133, %v134
  %136 = vadd.xlane.f32.xlu0 %v135
  %v137 = vpop.xlane.xlu0 %136
  %v138 = vrot.slane %v137, 4
  %v139 = vadd.f32 %v137, %v138
  %v140 = vrot.slane %v139, 2
  %v141 = vadd.f32 %v139, %v140
  %v142 = vrot.slane %v141, 1
  %v143 = vadd.f32 %v141, %v142
  %s144 = vtos %v143
  %vm145 = vcmp.eq.s32.totalorder %v37, 3
  %v146 = vstv %s144
  %v147 = vsel %vm145, %v146, %v126
  %v148 = vsel %vm44, %v28, 0.0
  %v149 = vsel %vm82, %v29, 0.0
  %v150 = vadd.f32 %v148, %v149
  %151 = vadd.xlane.f32.xlu0 %v150
  %v152 = vpop.xlane.xlu0 %151
  %v153 = vrot.slane %v152, 4
  %v154 = vadd.f32 %v152, %v153
  %v155 = vrot.slane %v154, 2
  %v156 = vadd.f32 %v154, %v155
  %v157 = vrot.slane %v156, 1
  %v158 = vadd.f32 %v156, %v157
  %s159 = vtos %v158
  %vm160 = vcmp.eq.s32.totalorder %v37, 4
  %v161 = vstv %s159
  %v162 = vsel %vm160, %v161, %v147
  %v163 = vld [vmem:[%s4] sm:$0xff]
  %v164 = vadd.f32 %v163, %v162
  %165 = vst [vmem:[%s4] sm:$0xff] %v164
  // Predicated region
  $region22: #{reinforce_criterion.1} parent=0 // pred_check
    _
  $region23: #{reinforce_criterion.1} parent=0 // pred_check_branch
    %167 = sbr.rel (0) target = $region25
  $region24: #{reinforce_criterion.1} parent=0 // pred_region
    _
  $region25: #{reinforce_criterion.1} parent=0 // pred_fallthru
    _
  // Predicated region
  $region26: #{reinforce_criterion.1} parent=0 // pred_check
    _
  $region27: #{reinforce_criterion.1} parent=0 // pred_check_branch
    %169 = sbr.rel (0) target = $region29
  $region28: #{reinforce_criterion.1} parent=0 // pred_region
    _
  $region29: #{reinforce_criterion.1} parent=0 // pred_fallthru
    _

</llo_original>
